<compile_context>
chip_gen: v6e
topology: v6e:2x2x1
jax: 0.10.0
libtpu: 0.0.40
codegen_flags: <defaults>
</compile_context>

<pallas_src>
import functools
import math

import jax
import jax.numpy as jnp
from jax.experimental import pallas as pl
from jax.experimental.pallas import tpu as pltpu

BN_EPS = 1e-5


def _round_up(x, m):
    return ((x + m - 1) // m) * m


# ---------------------------------------------------------------------------
# kernels
# ---------------------------------------------------------------------------
def _stats_kernel(x1_ref, x2_ref, p1_ref, p2_ref, stats_ref):
    # stats[:, 0:H]      = mean_w(x1)   stats[:, H:H+W]      = mean_h(x1)
    # stats[:, S:S+H]    = mean_w(x2)   stats[:, S+H:2S]     = mean_h(x2)
    # (S = H+W; remaining columns up to Spad are zero)  -- one lane-dense store.
    stats_ref[...] = (
        jnp.dot(x1_ref[...], p1_ref[...], preferred_element_type=jnp.float32)
        + jnp.dot(x2_ref[...], p2_ref[...], preferred_element_type=jnp.float32))


def _gates_kernel(stats_ref, selp_ref, band_ref, w1_ref, wh_ref, ww_ref,
                  mavg_ref, gam_ref, bet_ref, gates_ref, *, H, W):
    S = H + W
    stats = stats_ref[...]                                     # (R, Spad)

    # --- channel_att (ECA): global avg pool as mean of per-H means, then the
    # zero-padded 1-D channel conv as a block-diagonal banded (R,R) matmul.
    pooled = jnp.dot(stats, selp_ref[...],
                     preferred_element_type=jnp.float32)        # (R, 1)
    sc = jax.nn.sigmoid(jnp.dot(band_ref[...], pooled,
                                preferred_element_type=jnp.float32))  # (R, 1)

    # --- local_att on the reduced tensors; xcat = [mean_w(xx) | mean_h(xx)]
    xcat = sc * stats[:, :S] + stats[:, S:2 * S]                # (R, H+W)

    # conv_1x1 fused over the batch: block-diagonal weight (B*Cr, B*C)
    z = jnp.dot(w1_ref[...], xcat, preferred_element_type=jnp.float32)  # (BCr, H+W)

    # BatchNorm2d training-mode batch stats (biased variance) over (B, H+W),
    # cross-batch reduce / broadcast via a tiny constant averaging matmul.
    rs = jnp.sum(z, axis=1, keepdims=True)                      # (BCr, 1)
    mu = jnp.dot(mavg_ref[...], rs, preferred_element_type=jnp.float32)
    d = z - mu
    vs = jnp.sum(d * d, axis=1, keepdims=True)
    var = jnp.dot(mavg_ref[...], vs, preferred_element_type=jnp.float32)
    a = jax.lax.rsqrt(var + BN_EPS) * gam_ref[...]
    zn = jnp.maximum(d * a + bet_ref[...], 0.0)                 # relu(bn(.))

    # F_h / F_w fused over the batch: block-diagonal weights (B*C, B*Cr)
    sh = jax.nn.sigmoid(jnp.dot(wh_ref[...], zn[:, :H],
                                preferred_element_type=jnp.float32))   # (R, H)
    sw = jax.nn.sigmoid(jnp.dot(ww_ref[...], zn[:, H:],
                                preferred_element_type=jnp.float32))   # (R, W)

    # pack [s_h | s_w | scale | 0-pad] into one lane-dense slab
    R = sh.shape[0]
    gpad = gates_ref.shape[1] - (S + 1)
    pieces = [sh, sw, sc]
    if gpad > 0:
        pieces.append(jnp.zeros((R, gpad), jnp.float32))
    gates_ref[...] = jnp.concatenate(pieces, axis=1)


def _apply_kernel(x1_ref, x2_ref, g_ref, eh_ref, ew_ref, o_ref, *, H, W):
    S = H + W
    g = g_ref[...]                                              # (rt, Gpad)
    sc = g[:, S:S + 1]                                          # (rt, 1)
    x = x1_ref[...] * sc + x2_ref[...]                          # (rt, HW)
    # expand per-H gate to the flat H*W lane axis (contraction depth H only)
    gh = jnp.dot(g[:, :H], eh_ref[...], preferred_element_type=jnp.float32)
    x = x * gh
    gw = jnp.dot(g[:, H:S], ew_ref[...], preferred_element_type=jnp.float32)
    o_ref[...] = x * gw


# ---------------------------------------------------------------------------
# wrapper helpers
# ---------------------------------------------------------------------------
def _vmem_budget():
    """VMEM budget for the streaming passes: ~3/4 of physical capacity,
    capped at 96 MiB (so 128 MiB v5e/v6e -> 96 MiB, 64 MiB v7x -> 48 MiB)."""
    try:
        cap = int(pltpu.get_tpu_info().vmem_capacity_bytes)
    except Exception:
        cap = 64 * 1024 * 1024
    return min((cap * 3) // 4, 96 * 1024 * 1024)


def _pick_row_tile(rows, bytes_per_row, const_bytes, budget_bytes):
    """Largest multiple-of-8 row tile whose double-buffered streaming working
    set plus resident constants fits the budget.  rows need not be divisible
    by the result (the grid uses pl.cdiv with a masked partial last block)."""
    avail = budget_bytes - const_bytes - (4 << 20)          # headroom
    rt = max(8, (avail // max(bytes_per_row, 1)) // 8 * 8)
    rt = min(rt, _round_up(rows, 8))
    return int(rt)


def init_cpam_params(key, channel, reduction=16, b=1, g=2):
    """Deterministic synthetic parameters matching the PyTorch shapes."""
    cr = channel // reduction
    k = int(abs((math.log(channel, 2) + b) / g))
    k = k if k % 2 else k + 1
    k1, k2, k3, k4 = jax.random.split(key, 4)
    return {
        'conv1d_w': jax.random.normal(k1, (k,), jnp.float32) * 0.3,           # Conv1d(1,1,k)
        'w1':       jax.random.normal(k2, (cr, channel), jnp.float32) * 0.2,  # conv_1x1
        'wh':       jax.random.normal(k3, (channel, cr), jnp.float32) * 0.2,  # F_h
        'ww':       jax.random.normal(k4, (channel, cr), jnp.float32) * 0.2,  # F_w
        'bn_gamma': jnp.ones((cr,), jnp.float32),
        'bn_beta':  jnp.zeros((cr,), jnp.float32),
    }


def build_cpam_consts(params, B, C, H, W):
    """Shape-dependent constants, built once outside the per-call path."""
    f32 = jnp.float32
    Cr = params['w1'].shape[0]
    wc = params['conv1d_w']
    k = wc.shape[0]
    pad = (k - 1) // 2
    HW, S = H * W, H + W
    BCr = B * Cr
    Spad = _round_up(2 * S, 128)

    # per-row spatial pooling matrices on the flat H*W lane axis
    hw_h = jnp.arange(HW) // W
    hw_w = jnp.arange(HW) % W
    ph = (hw_h[:, None] == jnp.arange(H)[None, :]).astype(f32) / W    # (HW, H)
    pw = (hw_w[:, None] == jnp.arange(W)[None, :]).astype(f32) / H    # (HW, W)

    def cat(parts):
        parts = [p for p in parts if p.shape[1] > 0]
        return jnp.concatenate(parts, axis=1)

    zS = jnp.zeros((HW, S), f32)
    ztail = jnp.zeros((HW, Spad - 2 * S), f32)
    p1 = cat([ph, pw, zS, ztail])          # x1 stats land in cols [0, S)
    p2 = cat([zS, ph, pw, ztail])          # x2 stats land in cols [S, 2S)

    # global-avg-pool selector: mean over the per-H means (cols 0..H-1)
    sel_pool = ((jnp.arange(Spad) < H).astype(f32) / H).reshape(Spad, 1)

    # ECA zero-padded 1-D conv along the channel axis as a banded matrix,
    # block-diagonal over the batch so it acts directly on (B*C) rows.
    idx = jnp.arange(C)
    diff = idx[None, :] - idx[:, None] + pad                 # band[c, c'] = wc[c'-c+pad]
    band = jnp.where((diff >= 0) & (diff < k),
                     wc[jnp.clip(diff, 0, k - 1)], 0.0).astype(f32)
    eye_b = jnp.eye(B, dtype=f32)
    band_blk = jnp.kron(eye_b, band)                         # (B*C, B*C)

    # one-hot gate-expansion matrices
    eh = (jnp.arange(H)[:, None] == hw_h[None, :]).astype(f32)   # (H, HW)
    ew = (jnp.arange(W)[:, None] == hw_w[None, :]).astype(f32)   # (W, HW)

    # block-diagonal 1x1-conv weights (fused over the batch) and BN helpers
    w1_blk = jnp.kron(eye_b, params['w1'].astype(f32))       # (B*Cr, B*C)
    wh_blk = jnp.kron(eye_b, params['wh'].astype(f32))       # (B*C, B*Cr)
    ww_blk = jnp.kron(eye_b, params['ww'].astype(f32))       # (B*C, B*Cr)
    mavg = jnp.kron(jnp.ones((B, B), f32),
                    jnp.eye(Cr, dtype=f32)) / float(B * S)   # cross-batch BN mean
    gamma_rows = jnp.tile(params['bn_gamma'].astype(f32), B).reshape(BCr, 1)
    beta_rows = jnp.tile(params['bn_beta'].astype(f32), B).reshape(BCr, 1)

    return {
        'p1': p1, 'p2': p2, 'sel_pool': sel_pool, 'band_blk': band_blk,
        'eh': eh, 'ew': ew,
        'w1_blk': w1_blk, 'wh_blk': wh_blk, 'ww_blk': ww_blk,
        'mavg': mavg, 'gamma_rows': gamma_rows, 'beta_rows': beta_rows,
    }


def cpam_pallas(x, params, consts=None):
    """x = (input1, input2), each (B, C, H, W) float32 (NCHW)."""
    in1, in2 = x
    B, C, H, W = in1.shape
    HW, S = H * W, H + W
    R = B * C
    Spad = _round_up(2 * S, 128)
    Gpad = _round_up(S + 1, 128)
    if consts is None:
        consts = build_cpam_consts(params, B, C, H, W)

    in1f = in1.reshape(R, HW).astype(jnp.float32)
    in2f = in2.reshape(R, HW).astype(jnp.float32)

    budget = _vmem_budget()
    # worst-case per-row streaming bytes (double-buffered) across both passes,
    # and worst-case resident-constant bytes (also counted double-buffered).
    bytes_per_row = max(2 * HW + Spad, 3 * HW + Gpad) * 4 * 2
    const_bytes = max(2 * HW * Spad, S * HW) * 4 * 2
    rt = _pick_row_tile(R, bytes_per_row, const_bytes, budget)
    grid = (pl.cdiv(R, rt),)
    big_params = pltpu.CompilerParams(dimension_semantics=("parallel",),
                                      vmem_limit_bytes=budget)

    # ---- pass 1: fused per-row pooled stats, one lane-dense output slab ----
    stats = pl.pallas_call(
        _stats_kernel,
        grid=grid,
        in_specs=[
            pl.BlockSpec((rt, HW), lambda i: (i, 0)),
            pl.BlockSpec((rt, HW), lambda i: (i, 0)),
            pl.BlockSpec((HW, Spad), lambda i: (0, 0)),
            pl.BlockSpec((HW, Spad), lambda i: (0, 0)),
        ],
        out_specs=pl.BlockSpec((rt, Spad), lambda i: (i, 0)),
        out_shape=jax.ShapeDtypeStruct((R, Spad), jnp.float32),
        compiler_params=big_params,
    )(in1f, in2f, consts['p1'], consts['p2'])

    # ---- fused ECA scale + local_att gates (single tiny VMEM-resident call) -
    vmem = pl.BlockSpec(memory_space=pltpu.MemorySpace.VMEM)
    gates = pl.pallas_call(
        functools.partial(_gates_kernel, H=H, W=W),
        out_shape=jax.ShapeDtypeStruct((R, Gpad), jnp.float32),
        in_specs=[vmem] * 9,
        out_specs=vmem,
    )(stats, consts['sel_pool'], consts['band_blk'], consts['w1_blk'],
      consts['wh_blk'], consts['ww_blk'], consts['mavg'],
      consts['gamma_rows'], consts['beta_rows'])

    # ---- pass 2: gated elementwise apply ------------------------------------
    outf = pl.pallas_call(
        functools.partial(_apply_kernel, H=H, W=W),
        grid=grid,
        in_specs=[
            pl.BlockSpec((rt, HW), lambda i: (i, 0)),
            pl.BlockSpec((rt, HW), lambda i: (i, 0)),
            pl.BlockSpec((rt, Gpad), lambda i: (i, 0)),
            pl.BlockSpec((H, HW), lambda i: (0, 0)),
            pl.BlockSpec((W, HW), lambda i: (0, 0)),
        ],
        out_specs=pl.BlockSpec((rt, HW), lambda i: (i, 0)),
        out_shape=jax.ShapeDtypeStruct((R, HW), jnp.float32),
        compiler_params=big_params,
    )(in1f, in2f, gates, consts['eh'], consts['ew'])

    return outf.reshape(B, C, H, W)


# ---------------------------------------------------------------------------
# plain-JAX reference (mirror of the PyTorch forward) for correctness checking
# ---------------------------------------------------------------------------
def cpam_reference(x, params):
    in1, in2 = x
    B, C, H, W = in1.shape
    wc = params['conv1d_w']
    k = wc.shape[0]
    pad = (k - 1) // 2

    # channel_att
    pooled = jnp.mean(in1, axis=(2, 3))                      # (B, C)
    pp = jnp.pad(pooled, ((0, 0), (pad, pad)))
    y = sum(wc[j] * pp[:, j:j + C] for j in range(k))        # Conv1d(1,1,k)
    scale = jax.nn.sigmoid(y)
    xx = in1 * scale[:, :, None, None] + in2

    # local_att  (BatchNorm2d in training mode: batch stats, biased variance;
    # TODO(synk): running-stat updates are a module-state side effect, not emitted)
    x_h = jnp.mean(xx, axis=3)                               # (B, C, H)
    x_w = jnp.mean(xx, axis=2)                               # (B, C, W)
    feat = jnp.concatenate([x_h, x_w], axis=2)               # (B, C, H+W)
    z = jnp.einsum('rc,bcl->brl', params['w1'], feat)
    mu = jnp.mean(z, axis=(0, 2), keepdims=True)
    var = jnp.mean((z - mu) ** 2, axis=(0, 2), keepdims=True)
    zn = (z - mu) / jnp.sqrt(var + BN_EPS)
    zn = zn * params['bn_gamma'][None, :, None] + params['bn_beta'][None, :, None]
    zr = jax.nn.relu(zn)
    zh, zw = zr[:, :, :H], zr[:, :, H:]
    s_h = jax.nn.sigmoid(jnp.einsum('cr,brh->bch', params['wh'], zh))
    s_w = jax.nn.sigmoid(jnp.einsum('cr,brw->bcw', params['ww'], zw))
    return xx * s_h[:, :, :, None] * s_w[:, :, None, :]


if __name__ == "__main__":
    key = jax.random.PRNGKey(0)
    B, C, H, W = 2, 32, 16, 16          # ch=32 -> reduction 16 -> Cr=2, eca k=3
    kx1, kx2, kp = jax.random.split(key, 3)
    input1 = jax.random.normal(kx1, (B, C, H, W), jnp.float32)
    input2 = jax.random.normal(kx2, (B, C, H, W), jnp.float32)
    params = init_cpam_params(kp, C)
    consts = build_cpam_consts(params, B, C, H, W)   # built once, outside per-call path

    out = cpam_pallas((input1, input2), params, consts)
    out = jax.block_until_ready(out)

    ref = cpam_reference((input1, input2), params)
    assert out.shape == (B, C, H, W)
    err = float(jnp.max(jnp.abs(out - ref)))
    assert jnp.allclose(out, ref, atol=1e-4, rtol=1e-3), f"max abs err {err}"
    print("KERNEL_OK")
</pallas_src>

<mosaic_0001>
module attributes {stable_mosaic.version = 11 : i64} {
  func.func @_stats_kernel(%arg0: i32, %arg1: memref<64x256xf32, #tpu.memory_space<vmem>>, %arg2: memref<64x256xf32, #tpu.memory_space<vmem>>, %arg3: memref<256x128xf32, #tpu.memory_space<vmem>>, %arg4: memref<256x128xf32, #tpu.memory_space<vmem>>, %arg5: memref<64x128xf32, #tpu.memory_space<vmem>>) attributes {dimension_semantics = [#tpu.dimension_semantics<parallel>], iteration_bounds = array<i64: 1>, scalar_prefetch = 0 : i64, scratch_operands = 0 : i64, tpu.core_type = #tpu.core_type<tc>, window_params = [{transform_indices = @transform_0, window_bounds = array<i64: 64, 256>}, {transform_indices = @transform_1, window_bounds = array<i64: 64, 256>}, {pipeline_mode = #tpu.pipeline_mode<synchronous>, transform_indices = @transform_2, window_bounds = array<i64: 256, 128>}, {pipeline_mode = #tpu.pipeline_mode<synchronous>, transform_indices = @transform_3, window_bounds = array<i64: 256, 128>}, {transform_indices = @transform_4, window_bounds = array<i64: 64, 128>}]} {
    %c0 = arith.constant 0 : index
    %c0_0 = arith.constant 0 : index
    %0 = vector.load %arg1[%c0, %c0_0] : memref<64x256xf32, #tpu.memory_space<vmem>>, vector<64x256xf32>
    %c0_1 = arith.constant 0 : index
    %c0_2 = arith.constant 0 : index
    %1 = vector.load %arg3[%c0_1, %c0_2] : memref<256x128xf32, #tpu.memory_space<vmem>>, vector<256x128xf32>
    %cst = arith.constant dense<0.000000e+00> : vector<64x128xf32>
    %2 = tpu.matmul %0, %1, %cst {dimension_numbers = #tpu.dot_dimension_numbers<[1], [0], [0], [1], [0, 0, 1, 1], [], []>} : vector<64x256xf32>, vector<256x128xf32>, vector<64x128xf32> -> vector<64x128xf32>
    %c0_3 = arith.constant 0 : index
    %c0_4 = arith.constant 0 : index
    %3 = vector.load %arg2[%c0_3, %c0_4] : memref<64x256xf32, #tpu.memory_space<vmem>>, vector<64x256xf32>
    %c0_5 = arith.constant 0 : index
    %c0_6 = arith.constant 0 : index
    %4 = vector.load %arg4[%c0_5, %c0_6] : memref<256x128xf32, #tpu.memory_space<vmem>>, vector<256x128xf32>
    %cst_7 = arith.constant dense<0.000000e+00> : vector<64x128xf32>
    %5 = tpu.matmul %3, %4, %cst_7 {dimension_numbers = #tpu.dot_dimension_numbers<[1], [0], [0], [1], [0, 0, 1, 1], [], []>} : vector<64x256xf32>, vector<256x128xf32>, vector<64x128xf32> -> vector<64x128xf32>
    %6 = arith.addf %2, %5 : vector<64x128xf32>
    %c0_8 = arith.constant 0 : index
    %c0_9 = arith.constant 0 : index
    %7 = vector.load %arg5[%c0_8, %c0_9] : memref<64x128xf32, #tpu.memory_space<vmem>>, vector<64x128xf32>
    tpu.vector_store %arg5[%c0_8, %c0_9], %6 {strides = array<i32>} : memref<64x128xf32, #tpu.memory_space<vmem>>, vector<64x128xf32>,
    return
  }
  func.func @transform_0(%arg0: i32) -> (i32, i32) {
    %c0_i32 = arith.constant 0 : i32
    %c0_i32_0 = arith.constant 0 : i32
    return %arg0, %c0_i32 : i32, i32
  }
  func.func @transform_1(%arg0: i32) -> (i32, i32) {
    %c0_i32 = arith.constant 0 : i32
    %c0_i32_0 = arith.constant 0 : i32
    return %arg0, %c0_i32 : i32, i32
  }
  func.func @transform_2(%arg0: i32) -> (i32, i32) {
    %c0_i32 = arith.constant 0 : i32
    %c0_i32_0 = arith.constant 0 : i32
    %c0_i32_1 = arith.constant 0 : i32
    return %c0_i32, %c0_i32_0 : i32, i32
  }
  func.func @transform_3(%arg0: i32) -> (i32, i32) {
    %c0_i32 = arith.constant 0 : i32
    %c0_i32_0 = arith.constant 0 : i32
    %c0_i32_1 = arith.constant 0 : i32
    return %c0_i32, %c0_i32_0 : i32, i32
  }
  func.func @transform_4(%arg0: i32) -> (i32, i32) {
    %c0_i32 = arith.constant 0 : i32
    %c0_i32_0 = arith.constant 0 : i32
    return %arg0, %c0_i32 : i32, i32
  }
}

</mosaic_0001>

<llo_original>
// kernel: tpu_custom_call.1
$region0: #{tpu_custom_call.1}
  #allocation0 [shape = 'u32[]', space=smem, size = 0x4, offset = 0x4, fixed_abs, tag = 'smem constant byte address 0x4 - core index']
  #allocation1 [shape = 'u32[144,128]{1,0:T(1,128)}', space=vmem, size = 0x12000, scoped, tag = 'internal scratch']
  %s0 = inlined_call_operand.hbm [shape: f32[64,256], index: 0, kind: input, shape index: {}]
  %s1 = inlined_call_operand.hbm [shape: f32[64,256], index: 1, kind: input, shape index: {}]
  %s2 = inlined_call_operand.hbm [shape: f32[256,128], index: 2, kind: input, shape index: {}]
  %s3 = inlined_call_operand.hbm [shape: f32[256,128], index: 3, kind: input, shape index: {}]
  %s4 = inlined_call_operand.hbm [shape: f32[64,128], index: 4, kind: output, shape index: {}]
  %s5 = sld [smem:[#allocation0]]
  $region42: #{tpu_custom_call.1} parent=0
    _
  %s7 = ssub.s32 1, %s5
  %s8 = scalar_select 0, %s7, %s5
  $region1: #{tpu_custom_call.1} parent=0
    #allocation2 [shape = 'u8[65536]{0}', space=vmem, size = 0x10000, scoped, tag = 'input window, operand 0, single buffered']
    #allocation3 [shape = 's32[1]{0}', space=sflag, size = 0x4, scoped, tag = 'scoped memory for tpu_custom_call.1']
    #allocation4 [shape = 's32[1]{0}', space=sflag, size = 0x4, scoped, tag = 'scoped memory for tpu_custom_call.1']
    #allocation5 [shape = 'u8[65536]{0}', space=vmem, size = 0x10000, scoped, tag = 'input window, operand 1, single buffered']
    #allocation6 [shape = 's32[1]{0}', space=sflag, size = 0x4, scoped, tag = 'scoped memory for tpu_custom_call.1']
    #allocation7 [shape = 'u8[131072]{0}', space=vmem, size = 0x20000, scoped, tag = 'input window, operand 2, single buffered']
    #allocation8 [shape = 'u8[131072]{0}', space=vmem, size = 0x20000, scoped, tag = 'input window, operand 3, single buffered']
    #allocation9 [shape = 's32[1]{0}', space=sflag, size = 0x4, scoped, tag = 'scoped memory for tpu_custom_call.1']
    #allocation10 [shape = 'u8[32768]{0}', space=vmem, size = 0x8000, scoped, tag = 'output window, operand 0, single buffered']
    %9 = vsyncpa [#allocation3], 0
    %10 = vsyncpa [#allocation6], 0
    %11 = vsyncpa [#allocation9], 0
    %12 = vsyncpa [#allocation4], 0
    // Predicated region
    $region2: #{tpu_custom_call.1} parent=1 // pred_check
      _
    $region3: #{tpu_custom_call.1} parent=1 // pred_check_branch
      %14 = sbr.rel (0) target = $region5
    $region4: #{tpu_custom_call.1} parent=1 // pred_region
      %s16 = ssub.s32 2048, 2048
      %17 = vsyncadd [#allocation3], %s16
      %s18 = sshll.u32 [#allocation2], 4
      %s19 = int_to_ptr.vmem [resolvable:$true] %s18
      %24 = dma.hbm_to_vmem [thread:$0]  %s0, 2048, %s19, [#allocation3], 256, 256, 16
    $region5: #{tpu_custom_call.1} parent=1 // pred_fallthru
      _
    // Predicated region
    $region6: #{tpu_custom_call.1} parent=1 // pred_check
      _
    $region7: #{tpu_custom_call.1} parent=1 // pred_check_branch
      %26 = sbr.rel (0) target = $region9
    $region8: #{tpu_custom_call.1} parent=1 // pred_region
      %s28 = ssub.s32 2048, 2048
      %29 = vsyncadd [#allocation6], %s28
      %s30 = sshll.u32 [#allocation5], 4
      %s31 = int_to_ptr.vmem [resolvable:$true] %s30
      %36 = dma.hbm_to_vmem [thread:$0]  %s1, 2048, %s31, [#allocation6], 256, 256, 16
    $region9: #{tpu_custom_call.1} parent=1 // pred_fallthru
      _
    // Predicated region
    $region10: #{tpu_custom_call.1} parent=1 // pred_check
      _
    $region11: #{tpu_custom_call.1} parent=1 // pred_check_branch
      %38 = sbr.rel (0) target = $region13
    $region12: #{tpu_custom_call.1} parent=1 // pred_region
      %s40 = ssub.s32 4096, 4096
      %41 = vsyncadd [#allocation6], %s40
      %s42 = sshll.u32 [#allocation7], 4
      %s43 = int_to_ptr.vmem [resolvable:$true] %s42
      %48 = dma.hbm_to_vmem [thread:$0]  %s2, 4096, %s43, [#allocation6], 128, 128, 8
    $region13: #{tpu_custom_call.1} parent=1 // pred_fallthru
      _
    // Predicated region
    $region14: #{tpu_custom_call.1} parent=1 // pred_check
      _
    $region15: #{tpu_custom_call.1} parent=1 // pred_check_branch
      %50 = sbr.rel (0) target = $region17
    $region16: #{tpu_custom_call.1} parent=1 // pred_region
      %s52 = ssub.s32 4096, 4096
      %53 = vsyncadd [#allocation9], %s52
      %s54 = sshll.u32 [#allocation8], 4
      %s55 = int_to_ptr.vmem [resolvable:$true] %s54
      %60 = dma.hbm_to_vmem [thread:$0]  %s3, 4096, %s55, [#allocation9], 128, 128, 8
    $region17: #{tpu_custom_call.1} parent=1 // pred_fallthru
      _
    // Predicated region
    $region18: #{tpu_custom_call.1} parent=1 // pred_check
      _
    $region19: #{tpu_custom_call.1} parent=1 // pred_check_branch
      %62 = sbr.rel (0) target = $region21
    $region20: #{tpu_custom_call.1} parent=1 // pred_region
      %63 = dma.done [#allocation3], 2048
    $region21: #{tpu_custom_call.1} parent=1 // pred_fallthru
      _
    // Predicated region
    $region22: #{tpu_custom_call.1} parent=1 // pred_check
      _
    $region23: #{tpu_custom_call.1} parent=1 // pred_check_branch
      %65 = sbr.rel (0) target = $region25
    $region24: #{tpu_custom_call.1} parent=1 // pred_region
      %66 = dma.done [#allocation6], 2048
    $region25: #{tpu_custom_call.1} parent=1 // pred_fallthru
      _
    // Predicated region
    $region26: #{tpu_custom_call.1} parent=1 // pred_check
      _
    $region27: #{tpu_custom_call.1} parent=1 // pred_check_branch
      %68 = sbr.rel (0) target = $region29
    $region28: #{tpu_custom_call.1} parent=1 // pred_region
      %69 = dma.done [#allocation6], 4096
    $region29: #{tpu_custom_call.1} parent=1 // pred_fallthru
      _
    // Predicated region
    $region30: #{tpu_custom_call.1} parent=1 // pred_check
      _
    $region31: #{tpu_custom_call.1} parent=1 // pred_check_branch
      %71 = sbr.rel (0) target = $region33
    $region32: #{tpu_custom_call.1} parent=1 // pred_region
      %72 = dma.done [#allocation9], 4096
    $region33: #{tpu_custom_call.1} parent=1 // pred_fallthru
      _
    %v73 = vld [vmem:[#allocation2] sm:$0xff]
    %v74 = vld [vmem:[#allocation2 + $0x8] sm:$0xff]
    %v75 = vld [vmem:[#allocation2 + $0x10] sm:$0xff]
    %v76 = vld [vmem:[#allocation2 + $0x18] sm:$0xff]
    %v77 = vld [vmem:[#allocation2 + $0x20] sm:$0xff]
    %v78 = vld [vmem:[#allocation2 + $0x28] sm:$0xff]
    %v79 = vld [vmem:[#allocation2 + $0x30] sm:$0xff]
    %v80 = vld [vmem:[#allocation2 + $0x38] sm:$0xff]
    %v81 = vld [vmem:[#allocation2 + $0x40] sm:$0xff]
    %v82 = vld [vmem:[#allocation2 + $0x48] sm:$0xff]
    %v83 = vld [vmem:[#allocation2 + $0x50] sm:$0xff]
    %v84 = vld [vmem:[#allocation2 + $0x58] sm:$0xff]
    %v85 = vld [vmem:[#allocation2 + $0x60] sm:$0xff]
    %v86 = vld [vmem:[#allocation2 + $0x68] sm:$0xff]
    %v87 = vld [vmem:[#allocation2 + $0x70] sm:$0xff]
    %v88 = vld [vmem:[#allocation2 + $0x78] sm:$0xff]
    %v89 = vld [vmem:[#allocation7] sm:$0xff]
    %v90 = vld [vmem:[#allocation7 + $0x8] sm:$0xff]
    %v91 = vld [vmem:[#allocation7 + $0x10] sm:$0xff]
    %v92 = vld [vmem:[#allocation7 + $0x18] sm:$0xff]
    %v93 = vld [vmem:[#allocation7 + $0x20] sm:$0xff]
    %v94 = vld [vmem:[#allocation7 + $0x28] sm:$0xff]
    %v95 = vld [vmem:[#allocation7 + $0x30] sm:$0xff]
    %v96 = vld [vmem:[#allocation7 + $0x38] sm:$0xff]
    %v97 = vld [vmem:[#allocation7 + $0x40] sm:$0xff]
    %v98 = vld [vmem:[#allocation7 + $0x48] sm:$0xff]
    %v99 = vld [vmem:[#allocation7 + $0x50] sm:$0xff]
    %v100 = vld [vmem:[#allocation7 + $0x58] sm:$0xff]
    %v101 = vld [vmem:[#allocation7 + $0x60] sm:$0xff]
    %v102 = vld [vmem:[#allocation7 + $0x68] sm:$0xff]
    %v103 = vld [vmem:[#allocation7 + $0x70] sm:$0xff]
    %v104 = vld [vmem:[#allocation7 + $0x78] sm:$0xff]
    %v105 = vld [vmem:[#allocation7 + $0x80] sm:$0xff]
    %v106 = vld [vmem:[#allocation7 + $0x88] sm:$0xff]
    %v107 = vld [vmem:[#allocation7 + $0x90] sm:$0xff]
    %v108 = vld [vmem:[#allocation7 + $0x98] sm:$0xff]
    %v109 = vld [vmem:[#allocation7 + $0xa0] sm:$0xff]
    %v110 = vld [vmem:[#allocation7 + $0xa8] sm:$0xff]
    %v111 = vld [vmem:[#allocation7 + $0xb0] sm:$0xff]
    %v112 = vld [vmem:[#allocation7 + $0xb8] sm:$0xff]
    %v113 = vld [vmem:[#allocation7 + $0xc0] sm:$0xff]
    %v114 = vld [vmem:[#allocation7 + $0xc8] sm:$0xff]
    %v115 = vld [vmem:[#allocation7 + $0xd0] sm:$0xff]
    %v116 = vld [vmem:[#allocation7 + $0xd8] sm:$0xff]
    %v117 = vld [vmem:[#allocation7 + $0xe0] sm:$0xff]
    %v118 = vld [vmem:[#allocation7 + $0xe8] sm:$0xff]
    %v119 = vld [vmem:[#allocation7 + $0xf0] sm:$0xff]
    %v120 = vld [vmem:[#allocation7 + $0xf8] sm:$0xff]
    %v121 = vld [vmem:[#allocation5] sm:$0xff]
    %v122 = vld [vmem:[#allocation5 + $0x8] sm:$0xff]
    %v123 = vld [vmem:[#allocation5 + $0x10] sm:$0xff]
    %v124 = vld [vmem:[#allocation5 + $0x18] sm:$0xff]
    %v125 = vld [vmem:[#allocation5 + $0x20] sm:$0xff]
    %v126 = vld [vmem:[#allocation5 + $0x28] sm:$0xff]
    %v127 = vld [vmem:[#allocation5 + $0x30] sm:$0xff]
    %v128 = vld [vmem:[#allocation5 + $0x38] sm:$0xff]
    %v129 = vld [vmem:[#allocation5 + $0x40] sm:$0xff]
    %v130 = vld [vmem:[#allocation5 + $0x48] sm:$0xff]
    %v131 = vld [vmem:[#allocation5 + $0x50] sm:$0xff]
    %v132 = vld [vmem:[#allocation5 + $0x58] sm:$0xff]
    %v133 = vld [vmem:[#allocation5 + $0x60] sm:$0xff]
    %v134 = vld [vmem:[#allocation5 + $0x68] sm:$0xff]
    %v135 = vld [vmem:[#allocation5 + $0x70] sm:$0xff]
    %v136 = vld [vmem:[#allocation5 + $0x78] sm:$0xff]
    %v137 = vld [vmem:[#allocation8] sm:$0xff]
    %v138 = vld [vmem:[#allocation8 + $0x8] sm:$0xff]
    %v139 = vld [vmem:[#allocation8 + $0x10] sm:$0xff]
    %v140 = vld [vmem:[#allocation8 + $0x18] sm:$0xff]
    %v141 = vld [vmem:[#allocation8 + $0x20] sm:$0xff]
    %v142 = vld [vmem:[#allocation8 + $0x28] sm:$0xff]
    %v143 = vld [vmem:[#allocation8 + $0x30] sm:$0xff]
    %v144 = vld [vmem:[#allocation8 + $0x38] sm:$0xff]
    %v145 = vld [vmem:[#allocation8 + $0x40] sm:$0xff]
    %v146 = vld [vmem:[#allocation8 + $0x48] sm:$0xff]
    %v147 = vld [vmem:[#allocation8 + $0x50] sm:$0xff]
    %v148 = vld [vmem:[#allocation8 + $0x58] sm:$0xff]
    %v149 = vld [vmem:[#allocation8 + $0x60] sm:$0xff]
    %v150 = vld [vmem:[#allocation8 + $0x68] sm:$0xff]
    %v151 = vld [vmem:[#allocation8 + $0x70] sm:$0xff]
    %v152 = vld [vmem:[#allocation8 + $0x78] sm:$0xff]
    %v153 = vld [vmem:[#allocation8 + $0x80] sm:$0xff]
    %v154 = vld [vmem:[#allocation8 + $0x88] sm:$0xff]
    %v155 = vld [vmem:[#allocation8 + $0x90] sm:$0xff]
    %v156 = vld [vmem:[#allocation8 + $0x98] sm:$0xff]
    %v157 = vld [vmem:[#allocation8 + $0xa0] sm:$0xff]
    %v158 = vld [vmem:[#allocation8 + $0xa8] sm:$0xff]
    %v159 = vld [vmem:[#allocation8 + $0xb0] sm:$0xff]
    %v160 = vld [vmem:[#allocation8 + $0xb8] sm:$0xff]
    %v161 = vld [vmem:[#allocation8 + $0xc0] sm:$0xff]
    %v162 = vld [vmem:[#allocation8 + $0xc8] sm:$0xff]
    %v163 = vld [vmem:[#allocation8 + $0xd0] sm:$0xff]
    %v164 = vld [vmem:[#allocation8 + $0xd8] sm:$0xff]
    %v165 = vld [vmem:[#allocation8 + $0xe0] sm:$0xff]
    %v166 = vld [vmem:[#allocation8 + $0xe8] sm:$0xff]
    %v167 = vld [vmem:[#allocation8 + $0xf0] sm:$0xff]
    %v168 = vld [vmem:[#allocation8 + $0xf8] sm:$0xff]
    %169 = vmatprep.subr.mxu0 0.0
    %170 = vmatpush1.msra.mxu0 %v152
    %171 = vmatprep.subr.mxu0 0.0
    %172 = vmatpush1.msra.mxu0 %v151
    %173 = vmatprep.subr.mxu0 0.0
    %174 = vmatpush1.msra.mxu0 %v150
    %175 = vmatprep.subr.mxu0 0.0
    %176 = vmatpush1.msra.mxu0 %v149
    %177 = vmatprep.subr.mxu0 0.0
    %178 = vmatpush1.msra.mxu0 %v148
    %179 = vmatprep.subr.mxu0 0.0
    %180 = vmatpush1.msra.mxu0 %v147
    %181 = vmatprep.subr.mxu0 0.0
    %182 = vmatpush1.msra.mxu0 %v146
    %183 = vmatprep.subr.mxu0 0.0
    %184 = vmatpush1.msra.mxu0 %v145
    %185 = vmatprep.subr.mxu0 0.0
    %186 = vmatpush1.msra.mxu0 %v144
    %187 = vmatprep.subr.mxu0 0.0
    %188 = vmatpush1.msra.mxu0 %v143
    %189 = vmatprep.subr.mxu0 0.0
    %190 = vmatpush1.msra.mxu0 %v142
    %191 = vmatprep.subr.mxu0 0.0
    %192 = vmatpush1.msra.mxu0 %v141
    %193 = vmatprep.subr.mxu0 0.0
    %194 = vmatpush1.msra.mxu0 %v140
    %195 = vmatprep.subr.mxu0 0.0
    %196 = vmatpush1.msra.mxu0 %v139
    %197 = vmatprep.subr.mxu0 0.0
    %198 = vmatpush1.msra.mxu0 %v138
    %199 = vmatprep.subr.mxu0 0.0
    %200 = vmatpush1.msra.mxu0 %v137
    %201 = vmatprep.subr.mxu0 0.0
    %202 = vmatpush2.msra.mxu0 %v168
    %203 = vmatprep.subr.mxu0 0.0
    %204 = vmatpush2.msra.mxu0 %v167
    %205 = vmatprep.subr.mxu0 0.0
    %206 = vmatpush2.msra.mxu0 %v166
    %207 = vmatprep.subr.mxu0 0.0
    %208 = vmatpush2.msra.mxu0 %v165
    %209 = vmatprep.subr.mxu0 0.0
    %210 = vmatpush2.msra.mxu0 %v164
    %211 = vmatprep.subr.mxu0 0.0
    %212 = vmatpush2.msra.mxu0 %v163
    %213 = vmatprep.subr.mxu0 0.0
    %214 = vmatpush2.msra.mxu0 %v162
    %215 = vmatprep.subr.mxu0 0.0
    %216 = vmatpush2.msra.mxu0 %v161
    %217 = vmatprep.subr.mxu0 0.0
    %218 = vmatpush2.msra.mxu0 %v160
    %219 = vmatprep.subr.mxu0 0.0
    %220 = vmatpush2.msra.mxu0 %v159
    %221 = vmatprep.subr.mxu0 0.0
    %222 = vmatpush2.msra.mxu0 %v158
    %223 = vmatprep.subr.mxu0 0.0
    %224 = vmatpush2.msra.mxu0 %v157
    %225 = vmatprep.subr.mxu0 0.0
    %226 = vmatpush2.msra.mxu0 %v156
    %227 = vmatprep.subr.mxu0 0.0
    %228 = vmatpush2.msra.mxu0 %v155
    %229 = vmatprep.subr.mxu0 0.0
    %230 = vmatpush2.msra.mxu0 %v154
    %231 = vmatprep.subr.mxu0 0.0
    %232 = vmatpush2.msra.mxu0 %v153
    %233 = vmatprep.mubr.f32.mxu0 %v122
    %234 = vmatmul.mubr.f32.gmra.mxu0 %v121
    %v235 = vpop.f32.mrf.mxu0
    %v236 = vadd.f32 0.0, %v235
    %v237 = vpop.f32.mrf.mxu0
    %238 = vmatprep.mubr.f32.mxu0 %v124
    %239 = vmatmul.mubr.f32.gmra.mxu0 %v123
    %v240 = vpop.f32.mrf.mxu0
    %v241 = vadd.f32 0.0, %v240
    %v242 = vpop.f32.mrf.mxu0
    %243 = vmatprep.mubr.f32.mxu0 %v126
    %244 = vmatmul.mubr.f32.gmra.mxu0 %v125
    %v245 = vpop.f32.mrf.mxu0
    %v246 = vadd.f32 0.0, %v245
    %v247 = vpop.f32.mrf.mxu0
    %248 = vmatprep.mubr.f32.mxu0 %v128
    %249 = vmatmul.mubr.f32.gmra.mxu0 %v127
    %v250 = vpop.f32.mrf.mxu0
    %v251 = vadd.f32 0.0, %v250
    %v252 = vpop.f32.mrf.mxu0
    %253 = vmatprep.mubr.f32.mxu0 %v130
    %254 = vmatmul.mubr.f32.gmra.mxu0 %v129
    %v255 = vpop.f32.mrf.mxu0
    %v256 = vadd.f32 0.0, %v255
    %v257 = vpop.f32.mrf.mxu0
    %258 = vmatprep.mubr.f32.mxu0 %v132
    %259 = vmatmul.mubr.f32.gmra.mxu0 %v131
    %v260 = vpop.f32.mrf.mxu0
    %v261 = vadd.f32 0.0, %v260
    %v262 = vpop.f32.mrf.mxu0
    %263 = vmatprep.mubr.f32.mxu0 %v134
    %264 = vmatmul.mubr.f32.gmra.mxu0 %v133
    %v265 = vpop.f32.mrf.mxu0
    %v266 = vadd.f32 0.0, %v265
    %v267 = vpop.f32.mrf.mxu0
    %268 = vmatprep.mubr.f32.mxu0 %v136
    %269 = vmatmul.mubr.f32.gmra.mxu0 %v135
    %v270 = vpop.f32.mrf.mxu0
    %v271 = vadd.f32 0.0, %v270
    %v272 = vpop.f32.mrf.mxu0
    %273 = vdwg.mxu0
    %274 = vmatprep.subr.mxu0 0.0
    %275 = vmatpush1.msra.mxu0 %v104
    %276 = vmatprep.subr.mxu0 0.0
    %277 = vmatpush1.msra.mxu0 %v103
    %278 = vmatprep.subr.mxu0 0.0
    %279 = vmatpush1.msra.mxu0 %v102
    %280 = vmatprep.subr.mxu0 0.0
    %281 = vmatpush1.msra.mxu0 %v101
    %282 = vmatprep.subr.mxu0 0.0
    %283 = vmatpush1.msra.mxu0 %v100
    %284 = vmatprep.subr.mxu0 0.0
    %285 = vmatpush1.msra.mxu0 %v99
    %286 = vmatprep.subr.mxu0 0.0
    %287 = vmatpush1.msra.mxu0 %v98
    %288 = vmatprep.subr.mxu0 0.0
    %289 = vmatpush1.msra.mxu0 %v97
    %290 = vmatprep.subr.mxu0 0.0
    %291 = vmatpush1.msra.mxu0 %v96
    %292 = vmatprep.subr.mxu0 0.0
    %293 = vmatpush1.msra.mxu0 %v95
    %294 = vmatprep.subr.mxu0 0.0
    %295 = vmatpush1.msra.mxu0 %v94
    %296 = vmatprep.subr.mxu0 0.0
    %297 = vmatpush1.msra.mxu0 %v93
    %298 = vmatprep.subr.mxu0 0.0
    %299 = vmatpush1.msra.mxu0 %v92
    %300 = vmatprep.subr.mxu0 0.0
    %301 = vmatpush1.msra.mxu0 %v91
    %302 = vmatprep.subr.mxu0 0.0
    %303 = vmatpush1.msra.mxu0 %v90
    %304 = vmatprep.subr.mxu0 0.0
    %305 = vmatpush1.msra.mxu0 %v89
    %306 = vmatprep.subr.mxu0 0.0
    %307 = vmatpush2.msra.mxu0 %v120
    %308 = vmatprep.subr.mxu0 0.0
    %309 = vmatpush2.msra.mxu0 %v119
    %310 = vmatprep.subr.mxu0 0.0
    %311 = vmatpush2.msra.mxu0 %v118
    %312 = vmatprep.subr.mxu0 0.0
    %313 = vmatpush2.msra.mxu0 %v117
    %314 = vmatprep.subr.mxu0 0.0
    %315 = vmatpush2.msra.mxu0 %v116
    %316 = vmatprep.subr.mxu0 0.0
    %317 = vmatpush2.msra.mxu0 %v115
    %318 = vmatprep.subr.mxu0 0.0
    %319 = vmatpush2.msra.mxu0 %v114
    %320 = vmatprep.subr.mxu0 0.0
    %321 = vmatpush2.msra.mxu0 %v113
    %322 = vmatprep.subr.mxu0 0.0
    %323 = vmatpush2.msra.mxu0 %v112
    %324 = vmatprep.subr.mxu0 0.0
    %325 = vmatpush2.msra.mxu0 %v111
    %326 = vmatprep.subr.mxu0 0.0
    %327 = vmatpush2.msra.mxu0 %v110
    %328 = vmatprep.subr.mxu0 0.0
    %329 = vmatpush2.msra.mxu0 %v109
    %330 = vmatprep.subr.mxu0 0.0
    %331 = vmatpush2.msra.mxu0 %v108
    %332 = vmatprep.subr.mxu0 0.0
    %333 = vmatpush2.msra.mxu0 %v107
    %334 = vmatprep.subr.mxu0 0.0
    %335 = vmatpush2.msra.mxu0 %v106
    %336 = vmatprep.subr.mxu0 0.0
    %337 = vmatpush2.msra.mxu0 %v105
    %338 = vmatprep.mubr.f32.mxu0 %v74
    %339 = vmatmul.mubr.f32.gmra.mxu0 %v73
    %v340 = vpop.f32.mrf.mxu0
    %v341 = vadd.f32 %v236, %v340
    %v342 = vpop.f32.mrf.mxu0
    %343 = vmatprep.mubr.f32.mxu0 %v76
    %344 = vmatmul.mubr.f32.gmra.mxu0 %v75
    %v345 = vpop.f32.mrf.mxu0
    %v346 = vadd.f32 %v241, %v345
    %v347 = vpop.f32.mrf.mxu0
    %348 = vmatprep.mubr.f32.mxu0 %v78
    %349 = vmatmul.mubr.f32.gmra.mxu0 %v77
    %v350 = vpop.f32.mrf.mxu0
    %v351 = vadd.f32 %v246, %v350
    %v352 = vpop.f32.mrf.mxu0
    %353 = vmatprep.mubr.f32.mxu0 %v80
    %354 = vmatmul.mubr.f32.gmra.mxu0 %v79
    %v355 = vpop.f32.mrf.mxu0
    %v356 = vadd.f32 %v251, %v355
    %v357 = vpop.f32.mrf.mxu0
    %358 = vmatprep.mubr.f32.mxu0 %v82
    %359 = vmatmul.mubr.f32.gmra.mxu0 %v81
    %v360 = vpop.f32.mrf.mxu0
    %v361 = vadd.f32 %v256, %v360
    %v362 = vpop.f32.mrf.mxu0
    %363 = vmatprep.mubr.f32.mxu0 %v84
    %364 = vmatmul.mubr.f32.gmra.mxu0 %v83
    %v365 = vpop.f32.mrf.mxu0
    %v366 = vadd.f32 %v261, %v365
    %v367 = vpop.f32.mrf.mxu0
    %368 = vmatprep.mubr.f32.mxu0 %v86
    %369 = vmatmul.mubr.f32.gmra.mxu0 %v85
    %v370 = vpop.f32.mrf.mxu0
    %v371 = vadd.f32 %v266, %v370
    %v372 = vpop.f32.mrf.mxu0
    %373 = vmatprep.mubr.f32.mxu0 %v88
    %374 = vmatmul.mubr.f32.gmra.mxu0 %v87
    %v375 = vpop.f32.mrf.mxu0
    %v376 = vadd.f32 %v271, %v375
    %v377 = vpop.f32.mrf.mxu0
    %378 = vdwg.mxu0
    %379 = vst [vmem:[#allocation10] sm:$0xff] %v341
    %380 = vst [vmem:[#allocation10 + $0x8] sm:$0xff] %v346
    %381 = vst [vmem:[#allocation10 + $0x10] sm:$0xff] %v351
    %382 = vst [vmem:[#allocation10 + $0x18] sm:$0xff] %v356
    %383 = vst [vmem:[#allocation10 + $0x20] sm:$0xff] %v361
    %384 = vst [vmem:[#allocation10 + $0x28] sm:$0xff] %v366
    %385 = vst [vmem:[#allocation10 + $0x30] sm:$0xff] %v371
    %386 = vst [vmem:[#allocation10 + $0x38] sm:$0xff] %v376
    // Predicated region
    $region34: #{tpu_custom_call.1} parent=1 // pred_check
      _
    $region35: #{tpu_custom_call.1} parent=1 // pred_check_branch
      %388 = sbr.rel (0) target = $region37
    $region36: #{tpu_custom_call.1} parent=1 // pred_region
      %s390 = ssub.s32 1024, 1024
      %391 = vsyncadd [#allocation4], %s390
      %s392 = sshll.u32 [#allocation10], 4
      %s393 = int_to_ptr.vmem [resolvable:$true] %s392
      %398 = dma.vmem_to_hbm [thread:$0]  %s393, 1024, %s4, [#allocation4], 128, 128, 8
    $region37: #{tpu_custom_call.1} parent=1 // pred_fallthru
      _
    // Predicated region
    $region38: #{tpu_custom_call.1} parent=1 // pred_check
      _
    $region39: #{tpu_custom_call.1} parent=1 // pred_check_branch
      %400 = sbr.rel (0) target = $region41
    $region40: #{tpu_custom_call.1} parent=1 // pred_region
      %401 = dma.done [#allocation4], 1024
    $region41: #{tpu_custom_call.1} parent=1 // pred_fallthru
      _
    %402 = vsyncpa [#allocation3], 1
    %403 = vsyncpa [#allocation6], 1
    %404 = vsyncpa [#allocation9], 1
    %405 = vsyncpa [#allocation4], 1

</llo_original>
